<compile_context>
chip_gen: v6e
topology: v6e:2x2x1
jax: 0.10.0
libtpu: 0.0.40
codegen_flags: <defaults>
</compile_context>

<pallas_src>
import jax
import jax.numpy as jnp
from jax.experimental import pallas as pl
from jax.experimental.pallas import tpu as pltpu


_LANES = 128


def _gain_kernel(gain_ref, x_ref, o_ref):
    # gain_ref: (1,) f32 scalar in SMEM; x_ref/o_ref: (tile_rows, W) VMEM tiles.
    g = gain_ref[0]
    if o_ref.dtype == x_ref.dtype and o_ref.dtype != jnp.float32:
        # Native-dtype multiply (bf16 VPU on v6e/v7x): no f32 round trip.
        o_ref[...] = x_ref[...] * g.astype(o_ref.dtype)
    else:
        o_ref[...] = (x_ref[...].astype(jnp.float32) * g).astype(o_ref.dtype)


def _chip_config():
    """Per-generation (block_bytes, vmem_limit_bytes)."""
    try:
        vmem = int(pltpu.get_tpu_info().vmem_capacity_bytes)
    except Exception:
        vmem = None
    if vmem is not None and vmem > 96 * 1024 * 1024:
        # v5e / v6e: 128 MiB VMEM -> big blocks shave per-grid-step overhead.
        return 16 * 1024 * 1024, 80 * 1024 * 1024
    # v7x-class (64 MiB VMEM per TC) or unknown: 8 MiB blocks,
    # 4x (double-buffered in + out) = 32 MiB of buffers, limit 40 MiB.
    return 8 * 1024 * 1024, 40 * 1024 * 1024


def _dim_semantics():
    """Row-grid semantics: CORE_PARALLEL on v7x (2 TCs/chip), else parallel."""
    try:
        kind = jax.devices()[0].device_kind.lower()
    except Exception:
        kind = ""
    core_parallel = getattr(pltpu, "CORE_PARALLEL", None)
    if core_parallel is not None and ("v7" in kind or "7x" in kind):
        return (core_parallel,)
    return ("parallel",)


def _choose_width(total, min_rows=8):
    """Widest 128-multiple dividing `total` that still gives rows >= min_rows;
    if none reaches min_rows, the narrowest divider (most rows)."""
    divs = [w for w in (4096, 2048, 1024, 512, 256, 128) if total % w == 0]
    if not divs:
        return None
    for w in divs:
        if total // w >= min_rows:
            return w
    return divs[-1]


def _run_2d(x2d, gain_f32, out_dtype, block_bytes, vmem_limit):
    rows, width = x2d.shape
    in_bytes = jnp.dtype(x2d.dtype).itemsize
    out_bytes = jnp.dtype(out_dtype).itemsize

    # Packed-sublane multiple: 8 for f32, 16 for bf16, 32 for int8/fp8.
    pack = max(8, 32 // in_bytes)

    # Row budget per block (~block_bytes of input), rounded to `pack`.
    budget_rows = max(pack, (block_bytes // (width * in_bytes)) // pack * pack)

    if rows <= 2 * pack:
        # Tiny array: one full-extent block (legal even if rows % 8 != 0).
        tile_rows = rows
        grid = (1,)
    else:
        # Keep at least 2 (ideally 4) blocks so the input/output DMAs overlap
        # and both TensorCores get work on v7x, even when everything fits in
        # a single block.
        min_blocks = 4 if rows >= 4 * pack else 2
        cap_rows = ((pl.cdiv(rows, min_blocks) + pack - 1) // pack) * pack
        tile_rows = max(pack, min(budget_rows, cap_rows))
        grid = (pl.cdiv(rows, tile_rows),)

    total = rows * width
    cost = pl.CostEstimate(
        flops=total,
        transcendentals=0,
        bytes_accessed=total * in_bytes + total * out_bytes,
    )

    return pl.pallas_call(
        _gain_kernel,
        out_shape=jax.ShapeDtypeStruct((rows, width), out_dtype),
        grid_spec=pltpu.PrefetchScalarGridSpec(
            num_scalar_prefetch=0,
            grid=grid,
            in_specs=[
                pl.BlockSpec(memory_space=pltpu.MemorySpace.SMEM),
                pl.BlockSpec((tile_rows, width), lambda i: (i, 0)),
            ],
            out_specs=pl.BlockSpec((tile_rows, width), lambda i: (i, 0)),
        ),
        compiler_params=pltpu.CompilerParams(
            dimension_semantics=_dim_semantics(),
            vmem_limit_bytes=vmem_limit,
        ),
        cost_estimate=cost,
    )(gain_f32, x2d)


def gain_forward(x, gain, *, block_bytes=None):
    """out = gain * x (forward of the Gain module).

    x:    any-shape array (NCHW in the reference usage)
    gain: shape (1,) scalar parameter (float32 in the reference module)
    """
    orig_shape = x.shape
    total = x.size
    gain = jnp.asarray(gain)
    out_dtype = jnp.promote_types(x.dtype, gain.dtype)
    gain_f32 = gain.reshape(-1).astype(jnp.float32)

    if total == 0:
        return jnp.zeros(orig_shape, dtype=out_dtype)

    default_block, vmem_limit = _chip_config()
    if block_bytes is None:
        block_bytes = default_block

    width = _choose_width(total)
    if width is not None:
        # Common case: element count divisible by 128 -> zero extra HBM passes.
        x2d = x.reshape(total // width, width)
        out2d = _run_2d(x2d, gain_f32, out_dtype, block_bytes, vmem_limit)
        return out2d.reshape(orig_shape)

    # Odd element count: kernel on the 128-divisible prefix, plain-jnp tail
    # (<128 elements). Avoids the old full-tensor pad + slice round trips.
    x_flat = x.reshape(-1)
    prefix_len = (total // _LANES) * _LANES
    gain_scalar = gain.reshape(())
    tail_out = (x_flat[prefix_len:] * gain_scalar).astype(out_dtype)
    if prefix_len == 0:
        return tail_out.reshape(orig_shape)
    pwidth = _choose_width(prefix_len)
    prefix2d = x_flat[:prefix_len].reshape(prefix_len // pwidth, pwidth)
    prefix_out = _run_2d(
        prefix2d, gain_f32, out_dtype, block_bytes, vmem_limit
    ).reshape(-1)
    return jnp.concatenate([prefix_out, tail_out]).reshape(orig_shape)


if __name__ == "__main__":
    key = jax.random.PRNGKey(0)
    # NCHW input, consistent with conv-style usage of the module.
    x = jax.random.normal(key, (2, 4, 16, 16), dtype=jnp.float32)

    # nn.Parameter(torch.zeros(1)) -> deterministic zero-initialized scalar.
    gain = jnp.zeros((1,), dtype=jnp.float32)
    out = jax.block_until_ready(gain_forward(x, gain))
    ref = gain * x
    assert out.shape == ref.shape and out.dtype == ref.dtype
    assert jnp.allclose(out, ref), "mismatch vs reference (gain=0)"

    # Non-zero gain to exercise the multiply path.
    gain2 = jnp.array([0.5], dtype=jnp.float32)
    out2 = jax.block_until_ready(gain_forward(x, gain2))
    assert jnp.allclose(out2, 0.5 * x, atol=1e-6), "mismatch (gain=0.5)"

    # Multi-block + ragged masked last tile (small block budget -> >1 step).
    x3 = jax.random.normal(jax.random.PRNGKey(1), (2, 8, 40, 128), dtype=jnp.float32)
    out3 = jax.block_until_ready(gain_forward(x3, gain2, block_bytes=128 * 1024))
    assert jnp.allclose(out3, 0.5 * x3, atol=1e-6), "mismatch (ragged tiles)"

    # bf16 input, f32 gain -> f32 output via promotion (f32 compute path).
    xb = x.astype(jnp.bfloat16)
    outb = jax.block_until_ready(gain_forward(xb, gain2))
    assert outb.dtype == jnp.float32
    assert jnp.allclose(outb, 0.5 * xb.astype(jnp.float32), atol=1e-2), "mismatch (bf16)"

    # Odd element count -> prefix-kernel + jnp tail path.
    x4 = jax.random.normal(jax.random.PRNGKey(2), (3, 5, 7, 5), dtype=jnp.float32)
    out4 = jax.block_until_ready(gain_forward(x4, gain2))
    assert jnp.allclose(out4, 0.5 * x4, atol=1e-6), "mismatch (prefix+tail)"

    # Tiny odd tensor (< 128 elements): pure jnp tail.
    x5 = jax.random.normal(jax.random.PRNGKey(3), (3, 5, 7), dtype=jnp.float32)
    out5 = jax.block_until_ready(gain_forward(x5, gain2))
    assert jnp.allclose(out5, 0.5 * x5, atol=1e-6), "mismatch (tiny odd)"

    print("KERNEL_OK")
</pallas_src>

<mosaic_0001>
module attributes {stable_mosaic.version = 11 : i64} {
  func.func @_gain_kernel(%arg0: i32, %arg1: memref<1xf32, #tpu.memory_space<smem>>, %arg2: memref<8x256xf32, #tpu.memory_space<vmem>>, %arg3: memref<8x256xf32, #tpu.memory_space<vmem>>) attributes {dimension_semantics = [#tpu.dimension_semantics<parallel>], iteration_bounds = array<i64: 1>, scalar_prefetch = 0 : i64, scratch_operands = 0 : i64, tpu.core_type = #tpu.core_type<tc>, window_params = [{transform_indices = @transform_0, window_bounds = array<i64: 1>}, {transform_indices = @transform_1, window_bounds = array<i64: 8, 256>}, {transform_indices = @transform_2, window_bounds = array<i64: 8, 256>}]} {
    %c0 = arith.constant 0 : index
    %0 = memref.load %arg1[%c0] : memref<1xf32, #tpu.memory_space<smem>>
    %c0_0 = arith.constant 0 : index
    %c0_1 = arith.constant 0 : index
    %1 = vector.load %arg2[%c0_0, %c0_1] : memref<8x256xf32, #tpu.memory_space<vmem>>, vector<8x256xf32>
    %2 = vector.broadcast %0 : f32 to vector<8x256xf32>
    %3 = arith.mulf %1, %2 : vector<8x256xf32>
    %c0_2 = arith.constant 0 : index
    %c0_3 = arith.constant 0 : index
    %4 = vector.load %arg3[%c0_2, %c0_3] : memref<8x256xf32, #tpu.memory_space<vmem>>, vector<8x256xf32>
    tpu.vector_store %arg3[%c0_2, %c0_3], %3 {strides = array<i32>} : memref<8x256xf32, #tpu.memory_space<vmem>>, vector<8x256xf32>,
    return
  }
  func.func @transform_0(%arg0: i32) -> i32 {
    %c0_i32 = arith.constant 0 : i32
    %c0_i32_0 = arith.constant 0 : i32
    return %c0_i32 : i32
  }
  func.func @transform_1(%arg0: i32) -> (i32, i32) {
    %c0_i32 = arith.constant 0 : i32
    %c0_i32_0 = arith.constant 0 : i32
    return %arg0, %c0_i32 : i32, i32
  }
  func.func @transform_2(%arg0: i32) -> (i32, i32) {
    %c0_i32 = arith.constant 0 : i32
    %c0_i32_0 = arith.constant 0 : i32
    return %arg0, %c0_i32 : i32, i32
  }
}

</mosaic_0001>

<llo_original>
// kernel: tpu_custom_call.1
$region0: #{tpu_custom_call.1}
  #allocation0 [shape = 'u32[]', space=smem, size = 0x4, offset = 0x4, fixed_abs, tag = 'smem constant byte address 0x4 - core index']
  #allocation1 [shape = 'u32[144,128]{1,0:T(1,128)}', space=vmem, size = 0x12000, scoped, tag = 'internal scratch']
  #allocation2 [shape = 'f32[1]{0:T(128)S(6)}', space=smem, size = 0x200, scoped, tag = 'scoped memory for tpu_custom_call.1']
  %s0 = inlined_call_operand.<no memory space> [shape: f32[1], index: 0, kind: input, shape index: {}]
  %s1 = inlined_call_operand.hbm [shape: f32[8,256], index: 1, kind: input, shape index: {}]
  %s2 = inlined_call_operand.hbm [shape: f32[8,256], index: 2, kind: output, shape index: {}]
  %s3 = sld [smem:[#allocation0]]
  $region22: #{tpu_custom_call.1} parent=0
    _
  %s5 = ssub.s32 1, %s3
  %s6 = scalar_select 0, %s5, %s3
  %7 = sst [smem:[#allocation2]] %s0
  $region1: #{tpu_custom_call.1} parent=0
    #allocation3 [shape = 'u8[8192]{0}', space=vmem, size = 0x2000, scoped, tag = 'input window, operand 1, single buffered']
    #allocation4 [shape = 's32[1]{0}', space=sflag, size = 0x4, scoped, tag = 'scoped memory for tpu_custom_call.1']
    #allocation5 [shape = 's32[1]{0}', space=sflag, size = 0x4, scoped, tag = 'scoped memory for tpu_custom_call.1']
    #allocation6 [shape = 'u8[8192]{0}', space=vmem, size = 0x2000, scoped, tag = 'output window, operand 0, single buffered']
    %8 = vsyncpa [#allocation4], 0
    %9 = vsyncpa [#allocation5], 0
    // Predicated region
    $region2: #{tpu_custom_call.1} parent=1 // pred_check
      _
    $region3: #{tpu_custom_call.1} parent=1 // pred_check_branch
      %11 = sbr.rel (0) target = $region5
    $region4: #{tpu_custom_call.1} parent=1 // pred_region
      _
    $region5: #{tpu_custom_call.1} parent=1 // pred_fallthru
      _
    // Predicated region
    $region6: #{tpu_custom_call.1} parent=1 // pred_check
      _
    $region7: #{tpu_custom_call.1} parent=1 // pred_check_branch
      %13 = sbr.rel (0) target = $region9
    $region8: #{tpu_custom_call.1} parent=1 // pred_region
      %s15 = ssub.s32 256, 256
      %16 = vsyncadd [#allocation4], %s15
      %s18 = sshll.u32 [#allocation3], 4
      %s19 = int_to_ptr.vmem [resolvable:$true] %s18
      %21 = dma.hbm_to_vmem [thread:$0]  %s1, 256, %s19, [#allocation4]
    $region9: #{tpu_custom_call.1} parent=1 // pred_fallthru
      _
    // Predicated region
    $region10: #{tpu_custom_call.1} parent=1 // pred_check
      _
    $region11: #{tpu_custom_call.1} parent=1 // pred_check_branch
      %23 = sbr.rel (0) target = $region13
    $region12: #{tpu_custom_call.1} parent=1 // pred_region
      %24 = dma.done [#allocation4], 256
    $region13: #{tpu_custom_call.1} parent=1 // pred_fallthru
      _
    %s25 = sld [smem:[#allocation2]]
    %v26 = vld [vmem:[#allocation3] sm:$0xff]
    %v27 = vld [vmem:[#allocation3 + $0x8] sm:$0xff]
    %v28 = vstv %s25
    %v29 = vmul.f32 %v26, %v28
    %v30 = vmul.f32 %v27, %v28
    %31 = vst [vmem:[#allocation6] sm:$0xff] %v29
    %32 = vst [vmem:[#allocation6 + $0x8] sm:$0xff] %v30
    // Predicated region
    $region14: #{tpu_custom_call.1} parent=1 // pred_check
      _
    $region15: #{tpu_custom_call.1} parent=1 // pred_check_branch
      %34 = sbr.rel (0) target = $region17
    $region16: #{tpu_custom_call.1} parent=1 // pred_region
      %s36 = ssub.s32 256, 256
      %37 = vsyncadd [#allocation5], %s36
      %s39 = sshll.u32 [#allocation6], 4
      %s40 = int_to_ptr.vmem [resolvable:$true] %s39
      %42 = dma.vmem_to_hbm [thread:$0]  %s40, 256, %s2, [#allocation5]
    $region17: #{tpu_custom_call.1} parent=1 // pred_fallthru
      _
    // Predicated region
    $region18: #{tpu_custom_call.1} parent=1 // pred_check
      _
    $region19: #{tpu_custom_call.1} parent=1 // pred_check_branch
      %44 = sbr.rel (0) target = $region21
    $region20: #{tpu_custom_call.1} parent=1 // pred_region
      %45 = dma.done [#allocation5], 256
    $region21: #{tpu_custom_call.1} parent=1 // pred_fallthru
      _
    %46 = vsyncpa [#allocation4], 1
    %47 = vsyncpa [#allocation5], 1

</llo_original>
